<compile_context>
chip_gen: v5e
topology: v5e:2x2
jax: 0.10.0
libtpu: 0.0.40
codegen_flags: <defaults>
</compile_context>

<pallas_src>
import numpy as np
import jax
import jax.numpy as jnp
from jax import lax
from jax.experimental import pallas as pl
from jax.experimental.pallas import tpu as pltpu


def yolo_layer_forward(x, anchors, classes):
    """Inference path of yolo_layer.forward (label=None).

    x:        (B, C, H, W) float32, C = A * (classes + 5)
    anchors:  (A, 2) float32, already divided by stride
    returns:  (B, A*H*W, classes + 5) float32
    """
    B, C, H, W = x.shape
    A = anchors.shape[0]
    C5 = classes + 5
    HW = H * W
    assert C == A * C5, "channel count must equal anchor_num * (classes + 5)"

    # glue: same as torch .view, plus lane-dense flattening of (H, W) -> H*W
    x4 = x.astype(jnp.float32).reshape(B, A, C5, HW)

    inv_w = 1.0 / float(W)
    inv_h = 1.0 / float(H)
    w_f = float(W)

    def kernel(anchors_ref, x_ref, o_ref):
        # anchors_ref: SMEM (A, 2) scalar prefetch (anchor_w, anchor_h), already /stride.
        # x_ref / o_ref block: (1, A, C5, HW) -- one batch slab per grid step.

        # ---- hoisted constants: channel selectors, grid offsets, per-channel scale ----
        ch = lax.broadcasted_iota(jnp.int32, (C5, HW), 0)       # sublane (channel) index
        hw_f = lax.broadcasted_iota(jnp.int32, (C5, HW), 1).astype(jnp.float32)
        # gy = hw // W, gx = hw % W, computed in f32 (exact for realistic YOLO grid sizes;
        # the +0.5 keeps floor() away from integer boundaries).
        gy = jnp.floor((hw_f + 0.5) * inv_w)
        gx = hw_f - gy * w_f

        is0 = ch == 0
        is1 = ch == 1
        is2 = ch == 2
        is3 = ch == 3
        use_exp = is2 | is3
        offset = jnp.where(is0, gx, jnp.where(is1, gy, 0.0))            # +grid_x / +grid_y
        scale = jnp.where(is0 | is2, inv_w,
                          jnp.where(is1 | is3, inv_h, 1.0))             # /W, /H, or 1

        # ---- per-anchor decode: fully unrolled (A is small), 1 lane-dense store each ----
        for a in range(A):
            slab = x_ref[0, a]                       # (C5, HW), lane-dense
            sig = jax.nn.sigmoid(slab)               # full-slab EUP op
            ex = jnp.exp(slab)                       # full-slab EUP op
            base = jnp.where(use_exp, ex, sig)
            mult = jnp.where(is2, anchors_ref[a, 0],
                             jnp.where(is3, anchors_ref[a, 1], 1.0))    # anchor_w / anchor_h
            # ch0: (sig+gx)/W  ch1: (sig+gy)/H  ch2: exp*aw/W  ch3: exp*ah/H  ch>=4: sig
            o_ref[0, a] = (base * mult + offset) * scale

    out = pl.pallas_call(
        kernel,
        out_shape=jax.ShapeDtypeStruct((B, A, C5, HW), jnp.float32),
        grid_spec=pltpu.PrefetchScalarGridSpec(
            num_scalar_prefetch=1,
            grid=(B,),
            in_specs=[pl.BlockSpec((1, A, C5, HW),
                                   lambda b, anch: (b, 0, 0, 0))],
            out_specs=pl.BlockSpec((1, A, C5, HW),
                                   lambda b, anch: (b, 0, 0, 0)),
        ),
        compiler_params=pltpu.CompilerParams(
            dimension_semantics=("parallel",)),
    )(anchors.astype(jnp.float32), x4)

    # glue: (B, A, C5, HW) -> (B, A, HW, C5) -> (B, A*H*W, C5), matching
    # torch.stack/cat(..., -1).view([B, -1, classes+5])
    return jnp.transpose(out, (0, 1, 3, 2)).reshape(B, A * HW, C5)


def _reference_forward(x, anchors, classes):
    """Pure-JAX reference mirroring the PyTorch forward (label=None)."""
    B, C, H, W = x.shape
    A = anchors.shape[0]
    C5 = classes + 5
    pred = jnp.transpose(x.reshape(B, A, C5, H, W), (0, 1, 3, 4, 2))  # (B,A,H,W,C5)
    grid_x = jnp.broadcast_to(jnp.arange(W, dtype=jnp.float32)[None, :], (H, W))
    grid_y = jnp.broadcast_to(jnp.arange(H, dtype=jnp.float32)[:, None], (H, W))
    aw = anchors[:, 0][None, :, None, None]
    ah = anchors[:, 1][None, :, None, None]
    pred_dx = jax.nn.sigmoid(pred[..., 0])
    pred_dy = jax.nn.sigmoid(pred[..., 1])
    pred_x = (pred_dx + grid_x) / W
    pred_y = (pred_dy + grid_y) / H
    pred_w = jnp.exp(pred[..., 2]) * aw / W
    pred_h = jnp.exp(pred[..., 3]) * ah / H
    pred_conf = jax.nn.sigmoid(pred[..., 4])
    pred_prob = jax.nn.sigmoid(pred[..., 5:])
    xywhc = jnp.stack([pred_x, pred_y, pred_w, pred_h, pred_conf], -1)
    bbox = jnp.concatenate([xywhc, pred_prob], -1)
    return bbox.reshape(B, -1, C5)


if __name__ == "__main__":
    # Deterministic "config block" (mirrors yolo_layer.__init__, no checkpoint load).
    block = {
        "stride": 32,
        "mask": "0,1,2",
        "anchors": "10,13, 16,30, 33,23, 30,61, 62,45, 59,119",
        "num": 6,
        "classes": 3,
        "width": 16,
        "height": 16,
        "ignore_thresh": 0.7,
    }
    stride = block["stride"]
    mask = list(eval(block["mask"]))
    anchors_np = (np.array(eval(block["anchors"]), dtype=np.float32)
                  .reshape(int(block["num"]), 2)[mask] / stride)
    classes = int(block["classes"])
    A = len(mask)

    B, H, W = 2, 16, 16
    C = A * (classes + 5)  # 3 * 8 = 24

    x = jax.random.normal(jax.random.PRNGKey(0), (B, C, H, W), dtype=jnp.float32)
    anchors = jnp.asarray(anchors_np)

    out = yolo_layer_forward(x, anchors, classes)
    out = jax.block_until_ready(out)

    ref = _reference_forward(x, anchors, classes)
    assert out.shape == (B, A * H * W, classes + 5), out.shape
    np.testing.assert_allclose(np.asarray(out), np.asarray(ref), rtol=1e-5, atol=1e-5)

    # TODO(synk): the training path (label != None, yolo_op: data-dependent per-target
    # scatter, IoU bookkeeping and host-side print) is not implemented; inference only.
    print("KERNEL_OK")
</pallas_src>

<mosaic_0001>
module attributes {stable_mosaic.version = 11 : i64} {
  func.func @kernel(%arg0: i32, %arg1: memref<3x2xf32, #tpu.memory_space<smem>>, %arg2: memref<1x3x8x256xf32, #tpu.memory_space<vmem>>, %arg3: memref<1x3x8x256xf32, #tpu.memory_space<vmem>>) attributes {dimension_semantics = [#tpu.dimension_semantics<parallel>], iteration_bounds = array<i64: 2>, scalar_prefetch = 1 : i64, scratch_operands = 0 : i64, tpu.core_type = #tpu.core_type<tc>, window_params = [{transform_indices = @transform_0, window_bounds = array<i64: 1, 3, 8, 256>}, {transform_indices = @transform_1, window_bounds = array<i64: 1, 3, 8, 256>}]} {
    %0 = tpu.iota {dimensions = array<i32: 0>} : vector<8x256xi32>
    %1 = tpu.iota {dimensions = array<i32: 1>} : vector<8x256xi32>
    %2 = arith.sitofp %1 : vector<8x256xi32> to vector<8x256xf32>
    %cst = arith.constant 5.000000e-01 : f32
    %3 = vector.broadcast %cst : f32 to vector<8x256xf32>
    %4 = arith.addf %2, %3 : vector<8x256xf32>
    %cst_0 = arith.constant 6.250000e-02 : f32
    %5 = vector.broadcast %cst_0 : f32 to vector<8x256xf32>
    %6 = arith.mulf %4, %5 : vector<8x256xf32>
    %7 = math.floor %6 : vector<8x256xf32>
    %cst_1 = arith.constant 1.600000e+01 : f32
    %8 = vector.broadcast %cst_1 : f32 to vector<8x256xf32>
    %9 = arith.mulf %7, %8 : vector<8x256xf32>
    %10 = arith.subf %2, %9 : vector<8x256xf32>
    %c0_i32 = arith.constant 0 : i32
    %11 = vector.broadcast %c0_i32 : i32 to vector<8x256xi32>
    %12 = arith.cmpi eq, %0, %11 : vector<8x256xi32>
    %c1_i32 = arith.constant 1 : i32
    %13 = vector.broadcast %c1_i32 : i32 to vector<8x256xi32>
    %14 = arith.cmpi eq, %0, %13 : vector<8x256xi32>
    %c2_i32 = arith.constant 2 : i32
    %15 = vector.broadcast %c2_i32 : i32 to vector<8x256xi32>
    %16 = arith.cmpi eq, %0, %15 : vector<8x256xi32>
    %c3_i32 = arith.constant 3 : i32
    %17 = vector.broadcast %c3_i32 : i32 to vector<8x256xi32>
    %18 = arith.cmpi eq, %0, %17 : vector<8x256xi32>
    %19 = arith.ori %16, %18 : vector<8x256xi1>
    %cst_2 = arith.constant 0.000000e+00 : f32
    %20 = vector.broadcast %cst_2 : f32 to vector<8x256xf32>
    %21 = arith.select %14, %7, %20 : vector<8x256xi1>, vector<8x256xf32>
    %22 = arith.select %12, %10, %21 : vector<8x256xi1>, vector<8x256xf32>
    %23 = arith.ori %12, %16 : vector<8x256xi1>
    %24 = arith.ori %14, %18 : vector<8x256xi1>
    %cst_3 = arith.constant 6.250000e-02 : f32
    %cst_4 = arith.constant 1.000000e+00 : f32
    %25 = vector.broadcast %cst_3 : f32 to vector<8x256xf32>
    %26 = vector.broadcast %cst_4 : f32 to vector<8x256xf32>
    %27 = arith.select %24, %25, %26 : vector<8x256xi1>, vector<8x256xf32>
    %cst_5 = arith.constant 6.250000e-02 : f32
    %28 = vector.broadcast %cst_5 : f32 to vector<8x256xf32>
    %29 = arith.select %23, %28, %27 : vector<8x256xi1>, vector<8x256xf32>
    %c0 = arith.constant 0 : index
    %c0_6 = arith.constant 0 : index
    %c0_7 = arith.constant 0 : index
    %c0_8 = arith.constant 0 : index
    %30 = vector.load %arg2[%c0, %c0_6, %c0_7, %c0_8] : memref<1x3x8x256xf32, #tpu.memory_space<vmem>>, vector<1x1x8x256xf32>
    %31 = vector.shape_cast %30 : vector<1x1x8x256xf32> to vector<8x256xf32>
    %32 = arith.negf %31 : vector<8x256xf32>
    %33 = math.exp %32 : vector<8x256xf32>
    %cst_9 = arith.constant 1.000000e+00 : f32
    %34 = vector.broadcast %cst_9 : f32 to vector<8x256xf32>
    %35 = arith.addf %34, %33 : vector<8x256xf32>
    %36 = arith.divf %34, %35 : vector<8x256xf32>
    %37 = math.exp %31 : vector<8x256xf32>
    %38 = arith.select %19, %37, %36 : vector<8x256xi1>, vector<8x256xf32>
    %c0_10 = arith.constant 0 : index
    %c0_11 = arith.constant 0 : index
    %39 = memref.load %arg1[%c0_10, %c0_11] : memref<3x2xf32, #tpu.memory_space<smem>>
    %c0_12 = arith.constant 0 : index
    %c1 = arith.constant 1 : index
    %40 = memref.load %arg1[%c0_12, %c1] : memref<3x2xf32, #tpu.memory_space<smem>>
    %cst_13 = arith.constant 1.000000e+00 : f32
    %41 = vector.broadcast %40 : f32 to vector<8x256xf32>
    %42 = vector.broadcast %cst_13 : f32 to vector<8x256xf32>
    %43 = arith.select %18, %41, %42 : vector<8x256xi1>, vector<8x256xf32>
    %44 = vector.broadcast %39 : f32 to vector<8x256xf32>
    %45 = arith.select %16, %44, %43 : vector<8x256xi1>, vector<8x256xf32>
    %46 = arith.mulf %38, %45 : vector<8x256xf32>
    %47 = arith.addf %46, %22 : vector<8x256xf32>
    %48 = arith.mulf %47, %29 : vector<8x256xf32>
    %c0_14 = arith.constant 0 : index
    %c0_15 = arith.constant 0 : index
    %c0_16 = arith.constant 0 : index
    %c0_17 = arith.constant 0 : index
    %49 = vector.load %arg3[%c0_14, %c0_15, %c0_16, %c0_17] : memref<1x3x8x256xf32, #tpu.memory_space<vmem>>, vector<1x1x8x256xf32>
    %50 = vector.shape_cast %49 : vector<1x1x8x256xf32> to vector<8x256xf32>
    %51 = vector.shape_cast %48 : vector<8x256xf32> to vector<1x1x8x256xf32>
    tpu.vector_store %arg3[%c0_14, %c0_15, %c0_16, %c0_17], %51 {strides = array<i32>} : memref<1x3x8x256xf32, #tpu.memory_space<vmem>>, vector<1x1x8x256xf32>,
    %c0_18 = arith.constant 0 : index
    %c1_19 = arith.constant 1 : index
    %c0_20 = arith.constant 0 : index
    %c0_21 = arith.constant 0 : index
    %52 = vector.load %arg2[%c0_18, %c1_19, %c0_20, %c0_21] : memref<1x3x8x256xf32, #tpu.memory_space<vmem>>, vector<1x1x8x256xf32>
    %53 = vector.shape_cast %52 : vector<1x1x8x256xf32> to vector<8x256xf32>
    %54 = arith.negf %53 : vector<8x256xf32>
    %55 = math.exp %54 : vector<8x256xf32>
    %cst_22 = arith.constant 1.000000e+00 : f32
    %56 = vector.broadcast %cst_22 : f32 to vector<8x256xf32>
    %57 = arith.addf %56, %55 : vector<8x256xf32>
    %58 = arith.divf %56, %57 : vector<8x256xf32>
    %59 = math.exp %53 : vector<8x256xf32>
    %60 = arith.select %19, %59, %58 : vector<8x256xi1>, vector<8x256xf32>
    %c1_23 = arith.constant 1 : index
    %c0_24 = arith.constant 0 : index
    %61 = memref.load %arg1[%c1_23, %c0_24] : memref<3x2xf32, #tpu.memory_space<smem>>
    %c1_25 = arith.constant 1 : index
    %c1_26 = arith.constant 1 : index
    %62 = memref.load %arg1[%c1_25, %c1_26] : memref<3x2xf32, #tpu.memory_space<smem>>
    %cst_27 = arith.constant 1.000000e+00 : f32
    %63 = vector.broadcast %62 : f32 to vector<8x256xf32>
    %64 = vector.broadcast %cst_27 : f32 to vector<8x256xf32>
    %65 = arith.select %18, %63, %64 : vector<8x256xi1>, vector<8x256xf32>
    %66 = vector.broadcast %61 : f32 to vector<8x256xf32>
    %67 = arith.select %16, %66, %65 : vector<8x256xi1>, vector<8x256xf32>
    %68 = arith.mulf %60, %67 : vector<8x256xf32>
    %69 = arith.addf %68, %22 : vector<8x256xf32>
    %70 = arith.mulf %69, %29 : vector<8x256xf32>
    %c0_28 = arith.constant 0 : index
    %c1_29 = arith.constant 1 : index
    %c0_30 = arith.constant 0 : index
    %c0_31 = arith.constant 0 : index
    %71 = vector.load %arg3[%c0_28, %c1_29, %c0_30, %c0_31] : memref<1x3x8x256xf32, #tpu.memory_space<vmem>>, vector<1x1x8x256xf32>
    %72 = vector.shape_cast %71 : vector<1x1x8x256xf32> to vector<8x256xf32>
    %73 = vector.shape_cast %70 : vector<8x256xf32> to vector<1x1x8x256xf32>
    tpu.vector_store %arg3[%c0_28, %c1_29, %c0_30, %c0_31], %73 {strides = array<i32>} : memref<1x3x8x256xf32, #tpu.memory_space<vmem>>, vector<1x1x8x256xf32>,
    %c0_32 = arith.constant 0 : index
    %c2 = arith.constant 2 : index
    %c0_33 = arith.constant 0 : index
    %c0_34 = arith.constant 0 : index
    %74 = vector.load %arg2[%c0_32, %c2, %c0_33, %c0_34] : memref<1x3x8x256xf32, #tpu.memory_space<vmem>>, vector<1x1x8x256xf32>
    %75 = vector.shape_cast %74 : vector<1x1x8x256xf32> to vector<8x256xf32>
    %76 = arith.negf %75 : vector<8x256xf32>
    %77 = math.exp %76 : vector<8x256xf32>
    %cst_35 = arith.constant 1.000000e+00 : f32
    %78 = vector.broadcast %cst_35 : f32 to vector<8x256xf32>
    %79 = arith.addf %78, %77 : vector<8x256xf32>
    %80 = arith.divf %78, %79 : vector<8x256xf32>
    %81 = math.exp %75 : vector<8x256xf32>
    %82 = arith.select %19, %81, %80 : vector<8x256xi1>, vector<8x256xf32>
    %c2_36 = arith.constant 2 : index
    %c0_37 = arith.constant 0 : index
    %83 = memref.load %arg1[%c2_36, %c0_37] : memref<3x2xf32, #tpu.memory_space<smem>>
    %c2_38 = arith.constant 2 : index
    %c1_39 = arith.constant 1 : index
    %84 = memref.load %arg1[%c2_38, %c1_39] : memref<3x2xf32, #tpu.memory_space<smem>>
    %cst_40 = arith.constant 1.000000e+00 : f32
    %85 = vector.broadcast %84 : f32 to vector<8x256xf32>
    %86 = vector.broadcast %cst_40 : f32 to vector<8x256xf32>
    %87 = arith.select %18, %85, %86 : vector<8x256xi1>, vector<8x256xf32>
    %88 = vector.broadcast %83 : f32 to vector<8x256xf32>
    %89 = arith.select %16, %88, %87 : vector<8x256xi1>, vector<8x256xf32>
    %90 = arith.mulf %82, %89 : vector<8x256xf32>
    %91 = arith.addf %90, %22 : vector<8x256xf32>
    %92 = arith.mulf %91, %29 : vector<8x256xf32>
    %c0_41 = arith.constant 0 : index
    %c2_42 = arith.constant 2 : index
    %c0_43 = arith.constant 0 : index
    %c0_44 = arith.constant 0 : index
    %93 = vector.load %arg3[%c0_41, %c2_42, %c0_43, %c0_44] : memref<1x3x8x256xf32, #tpu.memory_space<vmem>>, vector<1x1x8x256xf32>
    %94 = vector.shape_cast %93 : vector<1x1x8x256xf32> to vector<8x256xf32>
    %95 = vector.shape_cast %92 : vector<8x256xf32> to vector<1x1x8x256xf32>
    tpu.vector_store %arg3[%c0_41, %c2_42, %c0_43, %c0_44], %95 {strides = array<i32>} : memref<1x3x8x256xf32, #tpu.memory_space<vmem>>, vector<1x1x8x256xf32>,
    return
  }
  func.func @transform_0(%arg0: i32, %arg1: memref<3x2xf32, #tpu.memory_space<smem>>) -> (i32, i32, i32, i32) {
    %c0_i32 = arith.constant 0 : i32
    %c0_i32_0 = arith.constant 0 : i32
    %c0_i32_1 = arith.constant 0 : i32
    %c0_i32_2 = arith.constant 0 : i32
    return %arg0, %c0_i32, %c0_i32_0, %c0_i32_1 : i32, i32, i32, i32
  }
  func.func @transform_1(%arg0: i32, %arg1: memref<3x2xf32, #tpu.memory_space<smem>>) -> (i32, i32, i32, i32) {
    %c0_i32 = arith.constant 0 : i32
    %c0_i32_0 = arith.constant 0 : i32
    %c0_i32_1 = arith.constant 0 : i32
    %c0_i32_2 = arith.constant 0 : i32
    return %arg0, %c0_i32, %c0_i32_0, %c0_i32_1 : i32, i32, i32, i32
  }
}

</mosaic_0001>

<llo_original>
// kernel: tpu_custom_call.1
$region0: #{tpu_custom_call.1}
  #allocation0 [shape = 'u32[]', space=smem, size = 0x4, offset = 0x4, fixed_abs, tag = 'smem constant byte address 0x4 - core index']
  #allocation1 [shape = 'u32[72,128]{1,0:T(1,128)}', space=vmem, size = 0x9000, scoped, tag = 'internal scratch']
  #allocation2 [shape = 's32[1]{0}', space=sflag, size = 0x4, scoped, tag = 'scoped memory for tpu_custom_call.1']
  #allocation3 [shape = 'u8[2048]{0}', space=smem, size = 0x800, scoped, tag = 'prefetched SMEM operand 0']
  %s0 = inlined_call_operand.vmem [shape: f32[3,2], index: 0, kind: input, shape index: {}]
  %s1 = inlined_call_operand.hbm [shape: f32[2,3,8,256], index: 1, kind: input, shape index: {}]
  %s2 = inlined_call_operand.hbm [shape: f32[2,3,8,256], index: 2, kind: output, shape index: {}]
  %s3 = sld [smem:[#allocation0]]
  $region41: #{tpu_custom_call.1} parent=0
    _
  %s5 = ssub.s32 1, %s3
  %s6 = scalar_select 0, %s5, %s3
  %s8 = sshll.u32 %s0, 4
  %s9 = int_to_ptr.vmem [resolvable:$true] %s8
  %11 = dma.vmem_to_smem %s9, 64, [#allocation3], [#allocation2]
  %13 = dma.done [#allocation2], 64
  %14 = sfence
  $region1: #{tpu_custom_call.1} parent=0
    #allocation4 [shape = 'u8[49152]{0}', space=vmem, size = 0xc000, scoped, tag = 'input window, operand 1']
    #allocation5 [shape = 's32[2]{0}', space=sflag, size = 0x8, scoped, tag = 'scoped memory for tpu_custom_call.1']
    #allocation6 [shape = 's32[2]{0}', space=sflag, size = 0x8, scoped, tag = 'scoped memory for tpu_custom_call.1']
    #allocation7 [shape = 'u8[49152]{0}', space=vmem, size = 0xc000, scoped, tag = 'output window, operand 0']
    %15 = vsyncpa [#allocation5], 0
    %s16 = scalar_lea.sflag [#allocation5], 1
    %17 = vsyncpa %s16, 0
    %18 = vsyncpa [#allocation6], 0
    %s19 = scalar_lea.sflag [#allocation6], 1
    %20 = vsyncpa %s19, 0
    loop: start=0, step=1, limit=4
    $region2: #{tpu_custom_call.1} parent=1 // loop_pre_header
      _
    $region3: #{tpu_custom_call.1} parent=1 // loop_header
      %s22 = sphi 0, %s26
      %p23 = scmp.ge.s32.totalorder %s22, 4
      %s32 = sphi 0, %s34
      %s35 = sphi 0, %s32
      %s36 = sphi 0, %s35
      %s52 = sphi 0, %s36
      %s58 = sphi 0, %s60
      %s61 = sphi 0, %s58
      %s62 = sphi 0, %s61
      %s78 = sphi 0, %s62
    $region4: #{tpu_custom_call.1} parent=1 // loop_header_branch
      %25 = sbr.rel (%p23) target = $region8
    $region5: #{tpu_custom_call.1} parent=1 // loop_body
      %s27 = ssub.s32 %s22, 1
      %s28 = ssub.s32 %s22, 2
      %s29 = sadd.s32 %s22, 1
      %s30 = ssub.s32 %s22, %s29
      %p31 = scmp.eq.s32.totalorder %s30, 0
      %s33 = sadd.s32 %s32, 1
      %s34 = scalar_select %p31, %s32, %s33
      %p37 = pneg %p31
      %p38 = scmp.eq.s32.totalorder %s22, 1
      %p39 = por %p37, %p38
      %p40 = scmp.ne.s32.totalorder %s32, %s35
      %p41 = scmp.eq.s32.totalorder %s22, 0
      %p42 = por %p40, %p41
      %p43 = scmp.ne.s32.totalorder %s32, %s35
      %p44 = scmp.eq.s32.totalorder %s27, 1
      %p45 = por %p43, %p44
      %p46 = scmp.ne.s32.totalorder %s35, %s36
      %p47 = scmp.eq.s32.totalorder %s27, 0
      %p48 = por %p46, %p47
      %p49 = scmp.ne.s32.totalorder %s35, %s36
      %p50 = scmp.eq.s32.totalorder %s28, 1
      %p51 = por %p49, %p50
      %p53 = scmp.ne.s32.totalorder %s36, %s52
      %p54 = scmp.eq.s32.totalorder %s28, 0
      %p55 = por %p53, %p54
      %s56 = ssub.s32 %s22, %s29
      %p57 = scmp.eq.s32.totalorder %s56, 0
      %s59 = sadd.s32 %s58, 1
      %s60 = scalar_select %p57, %s58, %s59
      %p63 = pneg %p57
      %p64 = scmp.eq.s32.totalorder %s22, 1
      %p65 = por %p63, %p64
      %p66 = scmp.ne.s32.totalorder %s58, %s61
      %p67 = scmp.eq.s32.totalorder %s22, 0
      %p68 = por %p66, %p67
      %p69 = scmp.ne.s32.totalorder %s58, %s61
      %p70 = scmp.eq.s32.totalorder %s27, 1
      %p71 = por %p69, %p70
      %p72 = scmp.ne.s32.totalorder %s61, %s62
      %p73 = scmp.eq.s32.totalorder %s27, 0
      %p74 = por %p72, %p73
      %p75 = scmp.ne.s32.totalorder %s61, %s62
      %p76 = scmp.eq.s32.totalorder %s28, 1
      %p77 = por %p75, %p76
      %p79 = scmp.ne.s32.totalorder %s62, %s78
      %p80 = scmp.eq.s32.totalorder %s28, 0
      %p81 = por %p79, %p80
      %p82 = scmp.le.s32.totalorder 1, %s22
      %p83 = scmp.lt.s32.totalorder %s22, 3
      %p84 = pnand %p82, %p83
      %p85 = pneg %p84
      // Predicated region
      $region9: #{tpu_custom_call.1} parent=5 // pred_check
        _
      $region10: #{tpu_custom_call.1} parent=5 // pred_check_branch
        %87 = sbr.rel (%p84) target = $region12
      $region11: #{tpu_custom_call.1} parent=5 // pred_region
        %s88 = ssub.s32 %s22, 1
      $region12: #{tpu_custom_call.1} parent=5 // pred_fallthru
        _
      %p89 = scmp.lt.s32.totalorder %s22, 2
      // Predicated region
      $region13: #{tpu_custom_call.1} parent=5 // pred_check
        %p90 = pneg %p89
      $region14: #{tpu_custom_call.1} parent=5 // pred_check_branch
        %92 = sbr.rel (%p90) target = $region16
      $region15: #{tpu_custom_call.1} parent=5 // pred_region
        // Predicated region
        $region17: #{tpu_custom_call.1} parent=15 // pred_check
          %p93 = pneg %p42
        $region18: #{tpu_custom_call.1} parent=15 // pred_check_branch
          %95 = sbr.rel (%p93) target = $region20
        $region19: #{tpu_custom_call.1} parent=15 // pred_region
          %s96 = sand.u32 %s32, 1
          %s97 = scalar_lea.sflag [#allocation5], %s96
          %s98 = sand.u32 %s32, 1
          %s99 = smul.addr %s98, 48
          %s100 = scalar_lea.vmem [#allocation4], %s99
          %102 = vsyncadd %s97, 0
          %s103 = smul.addr %s22, 6
          %s104 = smul.addr %s103, 8
          %s105 = scalar_lea.hbm %s1, %s104
          %s106 = sshll.u32 %s105, 4
          %s107 = int_to_ptr.hbm [resolvable:$true] %s106
          %s108 = sshll.u32 %s100, 4
          %s109 = int_to_ptr.vmem [resolvable:$true] %s108
          %114 = dma.hbm_to_vmem [thread:$0]  %s107, 768, %s109, %s97, 256, 256, 16
        $region20: #{tpu_custom_call.1} parent=15 // pred_fallthru
          _
      $region16: #{tpu_custom_call.1} parent=5 // pred_fallthru
        _
      %p115 = scmp.le.s32.totalorder 1, %s22
      %p116 = scmp.lt.s32.totalorder %s22, 3
      %p117 = pnand %p115, %p116
      %p118 = pneg %p117
      // Predicated region
      $region21: #{tpu_custom_call.1} parent=5 // pred_check
        _
      $region22: #{tpu_custom_call.1} parent=5 // pred_check_branch
        %120 = sbr.rel (%p117) target = $region24
      $region23: #{tpu_custom_call.1} parent=5 // pred_region
        %s121 = ssub.s32 %s22, 1
        %s122 = sand.u32 %s35, 1
        %s123 = scalar_lea.sflag [#allocation5], %s122
        %s124 = sand.u32 %s35, 1
        %s125 = smul.addr %s124, 48
        %s126 = scalar_lea.vmem [#allocation4], %s125
        // Predicated region
        $region25: #{tpu_custom_call.1} parent=23 // pred_check
          %p127 = pneg %p48
        $region26: #{tpu_custom_call.1} parent=23 // pred_check_branch
          %129 = sbr.rel (%p127) target = $region28
        $region27: #{tpu_custom_call.1} parent=23 // pred_region
          %131 = dma.done %s123, 768
        $region28: #{tpu_custom_call.1} parent=23 // pred_fallthru
          _
        %s132 = sand.u32 %s35, 1
        %s133 = scalar_lea.sflag [#allocation5], %s132
        %s134 = sand.u32 %s35, 1
        %s135 = smul.addr %s134, 48
        %s136 = scalar_lea.vmem [#allocation4], %s135
        %p137 = pneg %p48
        %p138 = pneg %p45
        %p139 = pneg %p74
        %p140 = pneg %p71
        %s141 = sand.u32 %s61, 1
        %s142 = scalar_lea.sflag [#allocation6], %s141
        %s143 = sand.u32 %s61, 1
        %s144 = smul.addr %s143, 48
        %s145 = scalar_lea.vmem [#allocation7], %s144
        %v146 = vlaneseq
        %v147 = vshrl.u32 %v146, 7
        %v148 = vlaneseq
        %v149 = vand.u32 %v148, 127
        %v150 = vadd.s32 %v149, 128
        %v151 = vcvt.s32.f32 %v149
        %v152 = vcvt.s32.f32 %v150
        %v153 = vadd.f32 %v151, 0.5
        %v154 = vadd.f32 %v152, 0.5
        %v155 = vmul.f32 %v153, 0.0625
        %v156 = vmul.f32 %v154, 0.0625
        %v157 = vfloor.f32 %v155
        %v158 = vfloor.f32 %v156
        %v159 = vmul.f32 %v157, 16.0
        %v160 = vmul.f32 %v158, 16.0
        %v161 = vsub.f32 %v151, %v159
        %v162 = vsub.f32 %v152, %v160
        %vm163 = vcmp.eq.s32.totalorder %v147, 0
        %vm164 = vcmp.eq.s32.totalorder %v147, 1
        %vm165 = vcmp.eq.s32.totalorder %v147, 2
        %vm166 = vcmp.eq.s32.totalorder %v147, 3
        %vm167 = vmor %vm165, %vm166
        %v168 = vsel %vm164, %v157, 0.0
        %v169 = vsel %vm164, %v158, 0.0
        %v170 = vsel %vm163, %v161, %v168
        %v171 = vsel %vm163, %v162, %v169
        %vm172 = vmor %vm163, %vm165
        %vm173 = vmor %vm164, %vm166
        %v174 = vsel %vm173, 0.0625, 1.0
        %v175 = vsel %vm172, 0.0625, %v174
        %v176 = vld [vmem:[%s126] sm:$0xff]
        %v177 = vld [vmem:[%s126 + $0x8] sm:$0xff]
        %v178 = vxor.u32 %v176, 2147483648
        %v179 = vxor.u32 %v177, 2147483648
        %v180 = vmul.f32 %v178, 1.442695
        %v181 = vpow.pop %v180
        %v182 = vmul.f32 %v179, 1.442695
        %v183 = vpow.pop %v182
        %v184 = vadd.f32 %v181, 1.0
        %v185 = vadd.f32 %v183, 1.0
        %v186 = vrcp.pop %v184
        %v187 = vmul.f32 %v184, %v186
        %v188 = vsub.f32 1.0, %v187
        %v189 = vmul.f32 %v186, %v188
        %v190 = vadd.f32 %v186, %v189
        %vm191 = vweird.f32 %v184
        %vm192 = vweird.f32 %v186
        %vm193 = vmor %vm191, %vm192
        %v194 = vsel %vm193, %v186, %v190
        %v195 = vand.u32 2147483647, %v184
        %vm196 = vcmp.eq.f32.partialorder %v195, 8.507059e+37
        %v197 = vand.u32 %v184, 2147483648
        %v198 = vor.u32 1.1754944e-38, %v197
        %v199 = vsel %vm196, %v198, %v194
        %v200 = vmul.f32 1.0, %v199
        %v201 = vrcp.pop %v185
        %v202 = vmul.f32 %v185, %v201
        %v203 = vsub.f32 1.0, %v202
        %v204 = vmul.f32 %v201, %v203
        %v205 = vadd.f32 %v201, %v204
        %vm206 = vweird.f32 %v185
        %vm207 = vweird.f32 %v201
        %vm208 = vmor %vm206, %vm207
        %v209 = vsel %vm208, %v201, %v205
        %v210 = vand.u32 2147483647, %v185
        %vm211 = vcmp.eq.f32.partialorder %v210, 8.507059e+37
        %v212 = vand.u32 %v185, 2147483648
        %v213 = vor.u32 1.1754944e-38, %v212
        %v214 = vsel %vm211, %v213, %v209
        %v215 = vmul.f32 1.0, %v214
        %v216 = vmul.f32 %v176, 1.442695
        %v217 = vpow.pop %v216
        %v218 = vmul.f32 %v177, 1.442695
        %v219 = vpow.pop %v218
        %v220 = vsel %vm167, %v217, %v200
        %v221 = vsel %vm167, %v219, %v215
        %s222 = sld [smem:[#allocation3]]
        %s223 = sld [smem:[#allocation3 + $0x1]]
        %v224 = vstv %s223
        %v225 = vsel %vm166, %v224, 1.0
        %v226 = vstv %s222
        %v227 = vsel %vm165, %v226, %v225
        %v228 = vmul.f32 %v220, %v227
        %v229 = vmul.f32 %v221, %v227
        %v230 = vadd.f32 %v228, %v170
        %v231 = vadd.f32 %v229, %v171
        %v232 = vmul.f32 %v230, %v175
        %v233 = vmul.f32 %v231, %v175
        %234 = vst [vmem:[%s145] sm:$0xff] %v232
        %235 = vst [vmem:[%s145 + $0x8] sm:$0xff] %v233
        %s236 = scalar_lea.vmem %s126, 16 [#allocation4]
        %v237 = vld [vmem:[%s236] sm:$0xff]
        %v238 = vld [vmem:[%s236 + $0x8] sm:$0xff]
        %v239 = vxor.u32 %v237, 2147483648
        %v240 = vxor.u32 %v238, 2147483648
        %v241 = vmul.f32 %v239, 1.442695
        %v242 = vpow.pop %v241
        %v243 = vmul.f32 %v240, 1.442695
        %v244 = vpow.pop %v243
        %v245 = vadd.f32 %v242, 1.0
        %v246 = vadd.f32 %v244, 1.0
        %v247 = vrcp.pop %v245
        %v248 = vmul.f32 %v245, %v247
        %v249 = vsub.f32 1.0, %v248
        %v250 = vmul.f32 %v247, %v249
        %v251 = vadd.f32 %v247, %v250
        %vm252 = vweird.f32 %v245
        %vm253 = vweird.f32 %v247
        %vm254 = vmor %vm252, %vm253
        %v255 = vsel %vm254, %v247, %v251
        %v256 = vand.u32 2147483647, %v245
        %vm257 = vcmp.eq.f32.partialorder %v256, 8.507059e+37
        %v258 = vand.u32 %v245, 2147483648
        %v259 = vor.u32 1.1754944e-38, %v258
        %v260 = vsel %vm257, %v259, %v255
        %v261 = vmul.f32 1.0, %v260
        %v262 = vrcp.pop %v246
        %v263 = vmul.f32 %v246, %v262
        %v264 = vsub.f32 1.0, %v263
        %v265 = vmul.f32 %v262, %v264
        %v266 = vadd.f32 %v262, %v265
        %vm267 = vweird.f32 %v246
        %vm268 = vweird.f32 %v262
        %vm269 = vmor %vm267, %vm268
        %v270 = vsel %vm269, %v262, %v266
        %v271 = vand.u32 2147483647, %v246
        %vm272 = vcmp.eq.f32.partialorder %v271, 8.507059e+37
        %v273 = vand.u32 %v246, 2147483648
        %v274 = vor.u32 1.1754944e-38, %v273
        %v275 = vsel %vm272, %v274, %v270
        %v276 = vmul.f32 1.0, %v275
        %v277 = vmul.f32 %v237, 1.442695
        %v278 = vpow.pop %v277
        %v279 = vmul.f32 %v238, 1.442695
        %v280 = vpow.pop %v279
        %v281 = vsel %vm167, %v278, %v261
        %v282 = vsel %vm167, %v280, %v276
        %s283 = sld [smem:[#allocation3 + $0x80]]
        %s284 = sld [smem:[#allocation3 + $0x81]]
        %v285 = vstv %s284
        %v286 = vsel %vm166, %v285, 1.0
        %v287 = vstv %s283
        %v288 = vsel %vm165, %v287, %v286
        %v289 = vmul.f32 %v281, %v288
        %v290 = vmul.f32 %v282, %v288
        %v291 = vadd.f32 %v289, %v170
        %v292 = vadd.f32 %v290, %v171
        %v293 = vmul.f32 %v291, %v175
        %v294 = vmul.f32 %v292, %v175
        %s295 = scalar_lea.vmem %s145, 16 [#allocation7]
        %296 = vst [vmem:[%s295] sm:$0xff] %v293
        %297 = vst [vmem:[%s295 + $0x8] sm:$0xff] %v294
        %s298 = scalar_lea.vmem %s126, 32 [#allocation4]
        %v299 = vld [vmem:[%s298] sm:$0xff]
        %v300 = vld [vmem:[%s298 + $0x8] sm:$0xff]
        %v301 = vxor.u32 %v299, 2147483648
        %v302 = vxor.u32 %v300, 2147483648
        %v303 = vmul.f32 %v301, 1.442695
        %v304 = vpow.pop %v303
        %v305 = vmul.f32 %v302, 1.442695
        %v306 = vpow.pop %v305
        %v307 = vadd.f32 %v304, 1.0
        %v308 = vadd.f32 %v306, 1.0
        %v309 = vrcp.pop %v307
        %v310 = vmul.f32 %v307, %v309
        %v311 = vsub.f32 1.0, %v310
        %v312 = vmul.f32 %v309, %v311
        %v313 = vadd.f32 %v309, %v312
        %vm314 = vweird.f32 %v307
        %vm315 = vweird.f32 %v309
        %vm316 = vmor %vm314, %vm315
        %v317 = vsel %vm316, %v309, %v313
        %v318 = vand.u32 2147483647, %v307
        %vm319 = vcmp.eq.f32.partialorder %v318, 8.507059e+37
        %v320 = vand.u32 %v307, 2147483648
        %v321 = vor.u32 1.1754944e-38, %v320
        %v322 = vsel %vm319, %v321, %v317
        %v323 = vmul.f32 1.0, %v322
        %v324 = vrcp.pop %v308
        %v325 = vmul.f32 %v308, %v324
        %v326 = vsub.f32 1.0, %v325
        %v327 = vmul.f32 %v324, %v326
        %v328 = vadd.f32 %v324, %v327
        %vm329 = vweird.f32 %v308
        %vm330 = vweird.f32 %v324
        %vm331 = vmor %vm329, %vm330
        %v332 = vsel %vm331, %v324, %v328
        %v333 = vand.u32 2147483647, %v308
        %vm334 = vcmp.eq.f32.partialorder %v333, 8.507059e+37
        %v335 = vand.u32 %v308, 2147483648
        %v336 = vor.u32 1.1754944e-38, %v335
        %v337 = vsel %vm334, %v336, %v332
        %v338 = vmul.f32 1.0, %v337
        %v339 = vmul.f32 %v299, 1.442695
        %v340 = vpow.pop %v339
        %v341 = vmul.f32 %v300, 1.442695
        %v342 = vpow.pop %v341
        %v343 = vsel %vm167, %v340, %v323
        %v344 = vsel %vm167, %v342, %v338
        %s345 = sld [smem:[#allocation3 + $0x100]]
        %s346 = sld [smem:[#allocation3 + $0x101]]
        %v347 = vstv %s346
        %v348 = vsel %vm166, %v347, 1.0
        %v349 = vstv %s345
        %v350 = vsel %vm165, %v349, %v348
        %v351 = vmul.f32 %v343, %v350
        %v352 = vmul.f32 %v344, %v350
        %v353 = vadd.f32 %v351, %v170
        %v354 = vadd.f32 %v352, %v171
        %v355 = vmul.f32 %v353, %v175
        %v356 = vmul.f32 %v354, %v175
        %s357 = scalar_lea.vmem %s145, 32 [#allocation7]
        %358 = vst [vmem:[%s357] sm:$0xff] %v355
        %359 = vst [vmem:[%s357 + $0x8] sm:$0xff] %v356
        %s360 = sand.u32 %s61, 1
        %s361 = scalar_lea.sflag [#allocation6], %s360
        %s362 = sand.u32 %s61, 1
        %s363 = smul.addr %s362, 48
        %s364 = scalar_lea.vmem [#allocation7], %s363
        // Predicated region
        $region29: #{tpu_custom_call.1} parent=23 // pred_check
          %p365 = pneg %p71
        $region30: #{tpu_custom_call.1} parent=23 // pred_check_branch
          %367 = sbr.rel (%p365) target = $region32
        $region31: #{tpu_custom_call.1} parent=23 // pred_region
          %369 = vsyncadd %s361, 0
          %s370 = smul.addr %s27, 6
          %s371 = smul.addr %s370, 8
          %s372 = scalar_lea.hbm %s2, %s371
          %s373 = sshll.u32 %s364, 4
          %s374 = int_to_ptr.vmem [resolvable:$true] %s373
          %s375 = sshll.u32 %s372, 4
          %s376 = int_to_ptr.hbm [resolvable:$true] %s375
          %381 = dma.vmem_to_hbm [thread:$0]  %s374, 768, %s376, %s361, 256, 256, 16
        $region32: #{tpu_custom_call.1} parent=23 // pred_fallthru
          _
      $region24: #{tpu_custom_call.1} parent=5 // pred_fallthru
        _
      %p382 = scmp.le.s32.totalorder 2, %s22
      // Predicated region
      $region33: #{tpu_custom_call.1} parent=5 // pred_check
        %p383 = pneg %p382
      $region34: #{tpu_custom_call.1} parent=5 // pred_check_branch
        %385 = sbr.rel (%p383) target = $region36
      $region35: #{tpu_custom_call.1} parent=5 // pred_region
        %s386 = ssub.s32 %s22, 2
        // Predicated region
        $region37: #{tpu_custom_call.1} parent=35 // pred_check
          %p387 = pneg %p77
        $region38: #{tpu_custom_call.1} parent=35 // pred_check_branch
          %389 = sbr.rel (%p387) target = $region40
        $region39: #{tpu_custom_call.1} parent=35 // pred_region
          %s390 = sand.u32 %s62, 1
          %s391 = scalar_lea.sflag [#allocation6], %s390
          %s392 = sand.u32 %s62, 1
          %s393 = smul.addr %s392, 48
          %s394 = scalar_lea.vmem [#allocation7], %s393
          %396 = dma.done %s391, 768
        $region40: #{tpu_custom_call.1} parent=35 // pred_fallthru
          _
      $region36: #{tpu_custom_call.1} parent=5 // pred_fallthru
        _
    $region6: #{tpu_custom_call.1} parent=1 // loop_footer
      %s26 = sadd.s32 1, %s22
    $region7: #{tpu_custom_call.1} parent=1 // loop_footer_branch
      %21 = sbr.rel target = $region3
    $region8: #{tpu_custom_call.1} parent=1 // loop_exit
      _
    %397 = vsyncpa [#allocation5], 1
    %s398 = scalar_lea.sflag [#allocation5], 1
    %399 = vsyncpa %s398, 1
    %400 = vsyncpa [#allocation6], 1
    %s401 = scalar_lea.sflag [#allocation6], 1
    %402 = vsyncpa %s401, 1

</llo_original>
